<compile_context>
chip_gen: v7x
topology: tpu7x:2x2x1
jax: 0.10.0
libtpu: 0.0.40
codegen_flags: <defaults>
</compile_context>

<pallas_src>
import math
import functools

import jax
import jax.numpy as jnp
from jax.experimental import pallas as pl
from jax.experimental.pallas import tpu as pltpu


def _round_up(x, m):
    return (x + m - 1) // m * m


def _tpu_vmem_capacity():
    try:
        info = pltpu.get_tpu_info()
        cap = getattr(info, "vmem_capacity_bytes", None)
        if cap:
            return int(cap)
    except Exception:
        pass
    return 64 << 20  # conservative fallback (v7x-sized)


def _ffn_kernel(x_ref, w1_ref, b1_ref, w2_ref, b2_ref, o_ref, acc_ref, *,
                approx_gelu):
    fi = pl.program_id(1)

    @pl.when(fi == 0)
    def _():
        # Fold b2 into the accumulator init (saves an epilogue VPU add).
        acc_ref[...] = jnp.broadcast_to(
            b2_ref[...].astype(jnp.float32), acc_ref.shape)

    # fc1 chunk: (tm, D) @ (D, tf) + b1[f-chunk], f32 accumulation on the MXU.
    h = jnp.dot(x_ref[...], w1_ref[...], preferred_element_type=jnp.float32)
    h = h + b1_ref[...].astype(jnp.float32)

    if approx_gelu:
        # tanh approximation (EUP path, frees VALU slots); NOT bit-identical to
        # torch.nn.GELU() default — opt-in only.
        h = jax.nn.gelu(h, approximate=True)
    else:
        # exact (erf-based) GELU, matching torch.nn.GELU() default
        inv_sqrt2 = jnp.float32(1.0 / math.sqrt(2.0))
        h = 0.5 * h * (1.0 + jax.lax.erf(h * inv_sqrt2))

    # dropout: eval-mode identity (see TODO at top)

    # fc2 chunk: cast h back to the weight dtype so bf16 inputs stay on the
    # fast bf16 MXU path; accumulate in the f32 VMEM scratch.
    h = h.astype(w2_ref.dtype)
    acc_ref[...] += jnp.dot(h, w2_ref[...], preferred_element_type=jnp.float32)

    @pl.when(fi == pl.num_programs(1) - 1)
    def _():
        o_ref[...] = acc_ref[...].astype(o_ref.dtype)


def _select_tiles(M, D, F, x_dtype, w_dtype, out_dtype):
    """Pick (tm, tf, M_pad, vmem_limit) from the chip's VMEM capacity."""
    cap = _tpu_vmem_capacity()
    budget = cap - (8 << 20)  # leave headroom for Mosaic internal scratch

    x_it = jnp.dtype(x_dtype).itemsize
    w_it = jnp.dtype(w_dtype).itemsize
    o_it = jnp.dtype(out_dtype).itemsize
    # sublane pack: 8 rows (f32), 16 (bf16), 32 (int8/fp8)
    pack = 8 * max(1, 4 // x_it)

    def est(tm, tf):
        return (2 * tm * D * x_it        # x blocks (double-buffered)
                + 2 * tm * D * o_it      # out blocks (double-buffered)
                + 2 * D * tf * w_it      # W1 chunk (double-buffered)
                + 2 * tf * D * w_it      # W2 chunk (double-buffered)
                + 2 * tf * w_it          # b1 chunk
                + 2 * D * w_it           # b2
                + tm * D * 4             # f32 accumulator scratch
                + tm * tf * 4            # f32 GELU intermediate
                + tm * tf * w_it)        # bf16/f32 cast copy of h for fc2

    # Hidden-dim tile: keep all of F resident when the weights fit comfortably,
    # otherwise stream chunks that divide F exactly (never pad weights).
    if 2 * (2 * D * F) * w_it <= 0.45 * budget:
        tf = F
    else:
        tf = next((t for t in (512, 256, 128) if F % t == 0), F)

    # Row tile: arithmetic intensity ~ tm when weights stream, so go as big as
    # the generation's VMEM allows.  128-MiB parts (v5e/v6e) target 1024 rows;
    # 64-MiB v7x targets 512.  Always a multiple of 128 for the MXU.
    target_tm = 1024 if cap >= (96 << 20) else 512
    if M >= 128:
        tm = min(target_tm, _round_up(M, 128))
        if cap < (96 << 20) and M >= 256:
            # v7x: make sure both TensorCores get at least one row tile.
            tm = min(tm, _round_up(-(-M // 2), 128))
        while tm > 128 and est(tm, tf) > budget:
            tm -= 128
    else:
        tm = _round_up(M, pack)

    M_pad = _round_up(M, tm)
    vmem_limit = int(min(max(est(tm, tf) + (4 << 20), 32 << 20), budget))
    return tm, tf, M_pad, vmem_limit


@functools.partial(
    jax.jit,
    static_argnames=("tm", "tf", "M_pad", "vmem_limit", "approx_gelu"))
def _ffn_call(x, w1, b1, w2, b2, *, tm, tf, M_pad, vmem_limit, approx_gelu):
    N, T, D = x.shape
    F = w1.shape[1]
    M = N * T

    x2d = x.reshape(M, D)
    if M_pad != M:
        x2d = jnp.pad(x2d, ((0, M_pad - M), (0, 0)))

    b1r = b1.reshape(1, F)
    b2r = b2.reshape(1, D)

    n_row = M_pad // tm
    n_f = F // tf  # tf always divides F by construction

    x_it = jnp.dtype(x.dtype).itemsize
    w_it = jnp.dtype(w1.dtype).itemsize
    # Weights are re-streamed once per row tile only when F is chunked.
    weight_reads = n_row if n_f > 1 else 1
    cost = pl.CostEstimate(
        flops=4 * M_pad * D * F,                      # two matmuls
        transcendentals=M_pad * F,                    # erf/tanh per hidden elem
        bytes_accessed=(M_pad * D * x_it              # x in
                        + weight_reads * (2 * D * F + F + D) * w_it
                        + M_pad * D * x_it),          # out
    )

    kernel = functools.partial(_ffn_kernel, approx_gelu=approx_gelu)

    out2d = pl.pallas_call(
        kernel,
        out_shape=jax.ShapeDtypeStruct((M_pad, D), x.dtype),
        grid_spec=pltpu.PrefetchScalarGridSpec(
            num_scalar_prefetch=0,
            grid=(n_row, n_f),
            in_specs=[
                pl.BlockSpec((tm, D), lambda i, j: (i, 0)),   # x row tile
                pl.BlockSpec((D, tf), lambda i, j: (0, j)),   # W1 F-chunk
                pl.BlockSpec((1, tf), lambda i, j: (0, j)),   # b1 F-chunk
                pl.BlockSpec((tf, D), lambda i, j: (j, 0)),   # W2 F-chunk
                pl.BlockSpec((1, D), lambda i, j: (0, 0)),    # b2 (invariant)
            ],
            out_specs=pl.BlockSpec((tm, D), lambda i, j: (i, 0)),
            scratch_shapes=[pltpu.VMEM((tm, D), jnp.float32)],
        ),
        compiler_params=pltpu.CompilerParams(
            dimension_semantics=("parallel", "arbitrary"),
            vmem_limit_bytes=vmem_limit,
        ),
        cost_estimate=cost,
    )(x2d, w1, b1r, w2, b2r)

    return out2d[:M].reshape(N, T, D)


def feed_forward_network(x, w1, b1, w2, b2, *, approx_gelu=False):
    """x: (N, T, D); w1: (D, F); b1: (F,); w2: (F, D); b2: (D,)."""
    N, T, D = x.shape
    F = w1.shape[1]
    M = N * T
    tm, tf, M_pad, vmem_limit = _select_tiles(
        M, D, F, x.dtype, w1.dtype, x.dtype)
    return _ffn_call(x, w1, b1, w2, b2, tm=tm, tf=tf, M_pad=M_pad,
                     vmem_limit=vmem_limit, approx_gelu=approx_gelu)


def _reference_ffn(x, w1, b1, w2, b2):
    h = jnp.einsum("ntd,df->ntf", x, w1) + b1
    h = jax.nn.gelu(h, approximate=False)
    return jnp.einsum("ntf,fd->ntd", h, w2) + b2


if __name__ == "__main__":
    # Small shapes consistent with the module: (N, T, D) = (2, 8, 32), ffn = 64
    N, T, D, FFN = 2, 8, 32, 64

    key = jax.random.PRNGKey(0)
    kx, kw1, kb1, kw2, kb2 = jax.random.split(key, 5)

    x = jax.random.normal(kx, (N, T, D), dtype=jnp.float32)

    # Deterministic parameter init mimicking nn.Linear's Kaiming-uniform ranges.
    bound1 = 1.0 / math.sqrt(D)
    w1 = jax.random.uniform(kw1, (D, FFN), jnp.float32, -bound1, bound1)
    b1 = jax.random.uniform(kb1, (FFN,), jnp.float32, -bound1, bound1)
    bound2 = 1.0 / math.sqrt(FFN)
    w2 = jax.random.uniform(kw2, (FFN, D), jnp.float32, -bound2, bound2)
    b2 = jax.random.uniform(kb2, (D,), jnp.float32, -bound2, bound2)

    out = feed_forward_network(x, w1, b1, w2, b2)
    out = jax.block_until_ready(out)

    ref = _reference_ffn(x, w1, b1, w2, b2)
    assert out.shape == x.shape
    assert jnp.allclose(out, ref, atol=1e-5, rtol=1e-5), "mismatch vs reference"

    print("KERNEL_OK")
</pallas_src>

<mosaic_0001>
module attributes {stable_mosaic.version = 11 : i64} {
  func.func @_ffn_kernel(%arg0: i32, %arg1: i32, %arg2: memref<16x32xf32, #tpu.memory_space<vmem>>, %arg3: memref<32x64xf32, #tpu.memory_space<vmem>>, %arg4: memref<1x64xf32, #tpu.memory_space<vmem>>, %arg5: memref<64x32xf32, #tpu.memory_space<vmem>>, %arg6: memref<1x32xf32, #tpu.memory_space<vmem>>, %arg7: memref<16x32xf32, #tpu.memory_space<vmem>>, %arg8: memref<16x32xf32, #tpu.memory_space<vmem>>) attributes {dimension_semantics = [#tpu.dimension_semantics<parallel>, #tpu.dimension_semantics<arbitrary>], iteration_bounds = array<i64: 1, 1>, scalar_prefetch = 0 : i64, scratch_operands = 1 : i64, tpu.core_type = #tpu.core_type<tc>, window_params = [{transform_indices = @transform_0, window_bounds = array<i64: 16, 32>}, {transform_indices = @transform_1, window_bounds = array<i64: 32, 64>}, {transform_indices = @transform_2, window_bounds = array<i64: 1, 64>}, {transform_indices = @transform_3, window_bounds = array<i64: 64, 32>}, {pipeline_mode = #tpu.pipeline_mode<synchronous>, transform_indices = @transform_4, window_bounds = array<i64: 1, 32>}, {transform_indices = @transform_5, window_bounds = array<i64: 16, 32>}]} {
    %c0_i32 = arith.constant 0 : i32
    %0 = arith.cmpi eq, %arg1, %c0_i32 : i32
    %1 = arith.extui %0 : i1 to i32
    %c0_i32_0 = arith.constant 0 : i32
    %2 = arith.cmpi ne, %1, %c0_i32_0 : i32
    scf.if %2 {
      %c0_18 = arith.constant 0 : index
      %c0_19 = arith.constant 0 : index
      %25 = vector.load %arg6[%c0_18, %c0_19] : memref<1x32xf32, #tpu.memory_space<vmem>>, vector<1x32xf32>
      %26 = vector.shape_cast %25 : vector<1x32xf32> to vector<1x32xf32>
      %27 = vector.broadcast %26 : vector<1x32xf32> to vector<16x32xf32>
      %c0_20 = arith.constant 0 : index
      %c0_21 = arith.constant 0 : index
      %28 = vector.load %arg8[%c0_20, %c0_21] : memref<16x32xf32, #tpu.memory_space<vmem>>, vector<16x32xf32>
      tpu.vector_store %arg8[%c0_20, %c0_21], %27 {strides = array<i32>} : memref<16x32xf32, #tpu.memory_space<vmem>>, vector<16x32xf32>,
    } else {
    }
    %c0 = arith.constant 0 : index
    %c0_1 = arith.constant 0 : index
    %3 = vector.load %arg2[%c0, %c0_1] : memref<16x32xf32, #tpu.memory_space<vmem>>, vector<16x32xf32>
    %c0_2 = arith.constant 0 : index
    %c0_3 = arith.constant 0 : index
    %4 = vector.load %arg3[%c0_2, %c0_3] : memref<32x64xf32, #tpu.memory_space<vmem>>, vector<32x64xf32>
    %cst = arith.constant dense<0.000000e+00> : vector<16x64xf32>
    %5 = tpu.matmul %3, %4, %cst {dimension_numbers = #tpu.dot_dimension_numbers<[1], [0], [0], [1], [0, 0, 1, 1], [], []>} : vector<16x32xf32>, vector<32x64xf32>, vector<16x64xf32> -> vector<16x64xf32>
    %c0_4 = arith.constant 0 : index
    %c0_5 = arith.constant 0 : index
    %6 = vector.load %arg4[%c0_4, %c0_5] : memref<1x64xf32, #tpu.memory_space<vmem>>, vector<1x64xf32>
    %7 = vector.broadcast %6 : vector<1x64xf32> to vector<16x64xf32>
    %8 = arith.addf %5, %7 : vector<16x64xf32>
    %cst_6 = arith.constant 5.000000e-01 : f32
    %9 = vector.broadcast %cst_6 : f32 to vector<16x64xf32>
    %10 = arith.mulf %9, %8 : vector<16x64xf32>
    %cst_7 = arith.constant 0.707106769 : f32
    %11 = vector.broadcast %cst_7 : f32 to vector<16x64xf32>
    %12 = arith.mulf %8, %11 : vector<16x64xf32>
    %13 = math.erf %12 : vector<16x64xf32>
    %cst_8 = arith.constant 1.000000e+00 : f32
    %14 = vector.broadcast %cst_8 : f32 to vector<16x64xf32>
    %15 = arith.addf %14, %13 : vector<16x64xf32>
    %16 = arith.mulf %10, %15 : vector<16x64xf32>
    %c0_9 = arith.constant 0 : index
    %c0_10 = arith.constant 0 : index
    %17 = vector.load %arg8[%c0_9, %c0_10] : memref<16x32xf32, #tpu.memory_space<vmem>>, vector<16x32xf32>
    %c0_11 = arith.constant 0 : index
    %c0_12 = arith.constant 0 : index
    %18 = vector.load %arg5[%c0_11, %c0_12] : memref<64x32xf32, #tpu.memory_space<vmem>>, vector<64x32xf32>
    %cst_13 = arith.constant dense<0.000000e+00> : vector<16x32xf32>
    %19 = tpu.matmul %16, %18, %cst_13 {dimension_numbers = #tpu.dot_dimension_numbers<[1], [0], [0], [1], [0, 0, 1, 1], [], []>} : vector<16x64xf32>, vector<64x32xf32>, vector<16x32xf32> -> vector<16x32xf32>
    %20 = arith.addf %17, %19 : vector<16x32xf32>
    %c0_14 = arith.constant 0 : index
    %c0_15 = arith.constant 0 : index
    %21 = vector.load %arg8[%c0_14, %c0_15] : memref<16x32xf32, #tpu.memory_space<vmem>>, vector<16x32xf32>
    tpu.vector_store %arg8[%c0_14, %c0_15], %20 {strides = array<i32>} : memref<16x32xf32, #tpu.memory_space<vmem>>, vector<16x32xf32>,
    %c0_i32_16 = arith.constant 0 : i32
    %22 = arith.cmpi eq, %arg1, %c0_i32_16 : i32
    %23 = arith.extui %22 : i1 to i32
    %c0_i32_17 = arith.constant 0 : i32
    %24 = arith.cmpi ne, %23, %c0_i32_17 : i32
    scf.if %24 {
      %c0_18 = arith.constant 0 : index
      %c0_19 = arith.constant 0 : index
      %25 = vector.load %arg8[%c0_18, %c0_19] : memref<16x32xf32, #tpu.memory_space<vmem>>, vector<16x32xf32>
      %c0_20 = arith.constant 0 : index
      %c0_21 = arith.constant 0 : index
      %26 = vector.load %arg7[%c0_20, %c0_21] : memref<16x32xf32, #tpu.memory_space<vmem>>, vector<16x32xf32>
      tpu.vector_store %arg7[%c0_20, %c0_21], %25 {strides = array<i32>} : memref<16x32xf32, #tpu.memory_space<vmem>>, vector<16x32xf32>,
    } else {
    }
    return
  }
  func.func @transform_0(%arg0: i32, %arg1: i32) -> (i32, i32) {
    %c0_i32 = arith.constant 0 : i32
    %c0_i32_0 = arith.constant 0 : i32
    return %arg0, %c0_i32 : i32, i32
  }
  func.func @transform_1(%arg0: i32, %arg1: i32) -> (i32, i32) {
    %c0_i32 = arith.constant 0 : i32
    %c0_i32_0 = arith.constant 0 : i32
    return %c0_i32, %arg1 : i32, i32
  }
  func.func @transform_2(%arg0: i32, %arg1: i32) -> (i32, i32) {
    %c0_i32 = arith.constant 0 : i32
    %c0_i32_0 = arith.constant 0 : i32
    return %c0_i32, %arg1 : i32, i32
  }
  func.func @transform_3(%arg0: i32, %arg1: i32) -> (i32, i32) {
    %c0_i32 = arith.constant 0 : i32
    %c0_i32_0 = arith.constant 0 : i32
    return %arg1, %c0_i32 : i32, i32
  }
  func.func @transform_4(%arg0: i32, %arg1: i32) -> (i32, i32) {
    %c0_i32 = arith.constant 0 : i32
    %c0_i32_0 = arith.constant 0 : i32
    %c0_i32_1 = arith.constant 0 : i32
    return %c0_i32, %c0_i32_0 : i32, i32
  }
  func.func @transform_5(%arg0: i32, %arg1: i32) -> (i32, i32) {
    %c0_i32 = arith.constant 0 : i32
    %c0_i32_0 = arith.constant 0 : i32
    return %arg0, %c0_i32 : i32, i32
  }
}

</mosaic_0001>

<llo_original>
// kernel: _ffn_call.1
$region0: #{_ffn_call.1}
  #allocation0 [shape = 'u32[]', space=smem, size = 0x4, offset = 0x4, fixed_abs, tag = 'smem constant byte address 0x4 - core index']
  #allocation1 [shape = 'u32[144,128]{1,0:T(1,128)}', space=vmem, size = 0x12000, scoped, tag = 'internal scratch']
  #allocation2 [shape = 'f32[16,32]{1,0:T(8,128)}', space=vmem, size = 0x2000, scoped, tag = 'scratch operand']
  %s0 = inlined_call_operand.vmem [shape: f32[16,32], index: 0, kind: input, shape index: {}]
  %s1 = inlined_call_operand.vmem [shape: f32[32,64], index: 1, kind: input, shape index: {}]
  %s2 = inlined_call_operand.vmem [shape: f32[1,64], index: 2, kind: input, shape index: {}]
  %s3 = inlined_call_operand.vmem [shape: f32[64,32], index: 3, kind: input, shape index: {}]
  %s4 = inlined_call_operand.vmem [shape: f32[1,32], index: 4, kind: input, shape index: {}]
  %s5 = inlined_call_operand.hbm [shape: f32[16,32], index: 5, kind: output, shape index: {}]
  %s6 = sld [smem:[#allocation0]]
  $region38: #{_ffn_call.1} parent=0
    _
  %s8 = ssub.s32 1, %s6
  %s9 = scalar_select 0, %s8, %s6
  $region1: #{_ffn_call.1} parent=0
    #allocation3 [shape = 'u8[8192]{0}', space=vmem, size = 0x2000, scoped, tag = 'output window, operand 0, single buffered']
    #allocation4 [shape = 's32[1]{0}', space=sflag, size = 0x4, scoped, tag = 'scoped memory for _ffn_call.1']
    %10 = vsyncpa [#allocation4], 0
    // Predicated region
    $region2: #{_ffn_call.1} parent=1 // pred_check
      _
    $region3: #{_ffn_call.1} parent=1 // pred_check_branch
      %12 = sbr.rel (0) target = $region5
    $region4: #{_ffn_call.1} parent=1 // pred_region
      _
    $region5: #{_ffn_call.1} parent=1 // pred_fallthru
      _
    // Predicated region
    $region6: #{_ffn_call.1} parent=1 // pred_check
      _
    $region7: #{_ffn_call.1} parent=1 // pred_check_branch
      %14 = sbr.rel (0) target = $region9
    $region8: #{_ffn_call.1} parent=1 // pred_region
      _
    $region9: #{_ffn_call.1} parent=1 // pred_fallthru
      _
    // Predicated region
    $region10: #{_ffn_call.1} parent=1 // pred_check
      _
    $region11: #{_ffn_call.1} parent=1 // pred_check_branch
      %16 = sbr.rel (0) target = $region13
    $region12: #{_ffn_call.1} parent=1 // pred_region
      _
    $region13: #{_ffn_call.1} parent=1 // pred_fallthru
      _
    // Predicated region
    $region14: #{_ffn_call.1} parent=1 // pred_check
      _
    $region15: #{_ffn_call.1} parent=1 // pred_check_branch
      %18 = sbr.rel (0) target = $region17
    $region16: #{_ffn_call.1} parent=1 // pred_region
      _
    $region17: #{_ffn_call.1} parent=1 // pred_fallthru
      _
    // Predicated region
    $region18: #{_ffn_call.1} parent=1 // pred_check
      _
    $region19: #{_ffn_call.1} parent=1 // pred_check_branch
      %20 = sbr.rel (0) target = $region21
    $region20: #{_ffn_call.1} parent=1 // pred_region
      _
    $region21: #{_ffn_call.1} parent=1 // pred_fallthru
      _
    %p21 = scmp.eq.s32.totalorder 0, 0
    // Predicated region
    $region22: #{_ffn_call.1} parent=1 // pred_check
      %p22 = pneg %p21
    $region23: #{_ffn_call.1} parent=1 // pred_check_branch
      %24 = sbr.rel (%p22) target = $region25
    $region24: #{_ffn_call.1} parent=1 // pred_region
      %v25 = vld [vmem:[%s4] sm:$0x1]
      %v27 = vlaneseq
      %v28 = vshrl.u32 %v27, 7
      %v29 = vsub.s32 0, %v28
      %v30 = vrot.slane %v25, %v29
      %vm32 = vcmask 261120
      %33 = vst.msk [vmem:[#allocation2] sm:$0xff] %vm32, %v30
      %34 = vst.msk [vmem:[#allocation2 + $0x8] sm:$0xff] %vm32, %v30
    $region25: #{_ffn_call.1} parent=1 // pred_fallthru
      _
    %v35 = vld [vmem:[%s0] sm:$0xff]
    %v36 = vld [vmem:[%s0 + $0x8] sm:$0xff]
    %v37 = vld [vmem:[%s1] sm:$0xff]
    %v38 = vld [vmem:[%s1 + $0x8] sm:$0xff]
    %v39 = vld [vmem:[%s1 + $0x10] sm:$0xff]
    %v40 = vld [vmem:[%s1 + $0x18] sm:$0xff]
    %v41 = vld [vmem:[%s2] sm:$0x1]
    %v43 = vlaneseq
    %v44 = vshrl.u32 %v43, 7
    %v45 = vsub.s32 0, %v44
    %v46 = vrot.slane %v41, %v45
    %vm48 = vcmask 261120
    %v50 = vsel %vm48, %v35, 0
    %v53 = vsel %vm48, %v36, 0
    %55 = vmatprep.subr.mxu0 0.0
    %56 = vmatpush1.msra.mxu0 %v37
    %57 = vmatprep.subr.mxu0 0.0
    %58 = vmatpush1.msra.mxu0 %v38
    %59 = vmatprep.subr.mxu0 0.0
    %60 = vmatpush1.msra.mxu0 %v39
    %61 = vmatprep.subr.mxu0 0.0
    %62 = vmatpush1.msra.mxu0 %v40
    %63 = vmatprep.subr.mxu0 0.0
    %64 = vmatpush1.msra.mxu0 0.0
    %65 = vmatprep.subr.mxu0 0.0
    %66 = vmatpush1.msra.mxu0 0.0
    %67 = vmatprep.subr.mxu0 0.0
    %68 = vmatpush1.msra.mxu0 0.0
    %69 = vmatprep.subr.mxu0 0.0
    %70 = vmatpush1.msra.mxu0 0.0
    %71 = vmatprep.subr.mxu0 0.0
    %72 = vmatpush1.msra.mxu0 0.0
    %73 = vmatprep.subr.mxu0 0.0
    %74 = vmatpush1.msra.mxu0 0.0
    %75 = vmatprep.subr.mxu0 0.0
    %76 = vmatpush1.msra.mxu0 0.0
    %77 = vmatprep.subr.mxu0 0.0
    %78 = vmatpush1.msra.mxu0 0.0
    %79 = vmatprep.subr.mxu0 0.0
    %80 = vmatpush1.msra.mxu0 0.0
    %81 = vmatprep.subr.mxu0 0.0
    %82 = vmatpush1.msra.mxu0 0.0
    %83 = vmatprep.subr.mxu0 0.0
    %84 = vmatpush1.msra.mxu0 0.0
    %85 = vmatprep.subr.mxu0 0.0
    %86 = vmatpush1.msra.mxu0 0.0
    %87 = vmatprep.subr.mxu0 0.0
    %88 = vmatpush1.msra.mxu0 0.0
    %89 = vmatprep.subr.mxu0 0.0
    %90 = vmatpush1.msra.mxu0 0.0
    %91 = vmatprep.subr.mxu0 0.0
    %92 = vmatpush1.msra.mxu0 0.0
    %93 = vmatprep.subr.mxu0 0.0
    %94 = vmatpush1.msra.mxu0 0.0
    %95 = vmatprep.subr.mxu0 0.0
    %96 = vmatpush1.msra.mxu0 0.0
    %97 = vmatprep.subr.mxu0 0.0
    %98 = vmatpush1.msra.mxu0 0.0
    %99 = vmatprep.subr.mxu0 0.0
    %100 = vmatpush1.msra.mxu0 0.0
    %101 = vmatprep.subr.mxu0 0.0
    %102 = vmatpush1.msra.mxu0 0.0
    %103 = vmatprep.subr.mxu0 0.0
    %104 = vmatpush1.msra.mxu0 0.0
    %105 = vmatprep.subr.mxu0 0.0
    %106 = vmatpush1.msra.mxu0 0.0
    %107 = vmatprep.subr.mxu0 0.0
    %108 = vmatpush1.msra.mxu0 0.0
    %109 = vmatprep.subr.mxu0 0.0
    %110 = vmatpush1.msra.mxu0 0.0
    %111 = vmatprep.subr.mxu0 0.0
    %112 = vmatpush1.msra.mxu0 0.0
    %113 = vmatprep.subr.mxu0 0.0
    %114 = vmatpush1.msra.mxu0 0.0
    %115 = vmatprep.subr.mxu0 0.0
    %116 = vmatpush1.msra.mxu0 0.0
    %117 = vmatprep.subr.mxu0 0.0
    %118 = vmatpush1.msra.mxu0 0.0
    %119 = vmatprep.mubr.f32.mxu0 0.0
    %120 = vmatmul.mubr.f32.gmra.mrb[0].mxu0 %v50
    %v121 = vpop.f32.mrb[0].mxu0
    %v122 = vadd.f32 %v46, %v121
    %v123 = vpop.f32.mrb[0].mxu0
    %124 = vmatprep.mubr.f32.mxu0 0.0
    %125 = vmatmul.mubr.f32.gmra.mrb[0].mxu0 %v53
    %v126 = vpop.f32.mrb[0].mxu0
    %v127 = vadd.f32 %v46, %v126
    %v128 = vpop.f32.mrb[0].mxu0
    %129 = vdwg.mxu0
    %v130 = vmul.f32 %v122, 0.5
    %v131 = vmul.f32 %v127, 0.5
    %v132 = vmul.f32 %v122, 0.70710677
    %v133 = vmul.f32 %v127, 0.70710677
    %v134 = verf.f32.pop %v132
    %v135 = verf.f32.pop %v133
    %v136 = vadd.f32 %v134, 1.0
    %v137 = vadd.f32 %v135, 1.0
    %v138 = vmul.f32 %v130, %v136
    %v139 = vmul.f32 %v131, %v137
    %v140 = vld [vmem:[#allocation2] sm:$0xff]
    %v141 = vld [vmem:[#allocation2 + $0x8] sm:$0xff]
    %v142 = vld [vmem:[%s3] sm:$0xff]
    %v143 = vld [vmem:[%s3 + $0x8] sm:$0xff]
    %v144 = vld [vmem:[%s3 + $0x10] sm:$0xff]
    %v145 = vld [vmem:[%s3 + $0x18] sm:$0xff]
    %v146 = vld [vmem:[%s3 + $0x20] sm:$0xff]
    %v147 = vld [vmem:[%s3 + $0x28] sm:$0xff]
    %v148 = vld [vmem:[%s3 + $0x30] sm:$0xff]
    %v149 = vld [vmem:[%s3 + $0x38] sm:$0xff]
    %vm150 = vcmask 523264
    %v152 = vsel %vm150, %v138, 0
    %v155 = vsel %vm150, %v139, 0
    %157 = vmatprep.subr.mxu0 0.0
    %158 = vmatpush1.msra.mxu0 %v142
    %159 = vmatprep.subr.mxu0 0.0
    %160 = vmatpush1.msra.mxu0 %v143
    %161 = vmatprep.subr.mxu0 0.0
    %162 = vmatpush1.msra.mxu0 %v144
    %163 = vmatprep.subr.mxu0 0.0
    %164 = vmatpush1.msra.mxu0 %v145
    %165 = vmatprep.subr.mxu0 0.0
    %166 = vmatpush1.msra.mxu0 %v146
    %167 = vmatprep.subr.mxu0 0.0
    %168 = vmatpush1.msra.mxu0 %v147
    %169 = vmatprep.subr.mxu0 0.0
    %170 = vmatpush1.msra.mxu0 %v148
    %171 = vmatprep.subr.mxu0 0.0
    %172 = vmatpush1.msra.mxu0 %v149
    %173 = vmatprep.subr.mxu0 0.0
    %174 = vmatpush1.msra.mxu0 0.0
    %175 = vmatprep.subr.mxu0 0.0
    %176 = vmatpush1.msra.mxu0 0.0
    %177 = vmatprep.subr.mxu0 0.0
    %178 = vmatpush1.msra.mxu0 0.0
    %179 = vmatprep.subr.mxu0 0.0
    %180 = vmatpush1.msra.mxu0 0.0
    %181 = vmatprep.subr.mxu0 0.0
    %182 = vmatpush1.msra.mxu0 0.0
    %183 = vmatprep.subr.mxu0 0.0
    %184 = vmatpush1.msra.mxu0 0.0
    %185 = vmatprep.subr.mxu0 0.0
    %186 = vmatpush1.msra.mxu0 0.0
    %187 = vmatprep.subr.mxu0 0.0
    %188 = vmatpush1.msra.mxu0 0.0
    %189 = vmatprep.subr.mxu0 0.0
    %190 = vmatpush1.msra.mxu0 0.0
    %191 = vmatprep.subr.mxu0 0.0
    %192 = vmatpush1.msra.mxu0 0.0
    %193 = vmatprep.subr.mxu0 0.0
    %194 = vmatpush1.msra.mxu0 0.0
    %195 = vmatprep.subr.mxu0 0.0
    %196 = vmatpush1.msra.mxu0 0.0
    %197 = vmatprep.subr.mxu0 0.0
    %198 = vmatpush1.msra.mxu0 0.0
    %199 = vmatprep.subr.mxu0 0.0
    %200 = vmatpush1.msra.mxu0 0.0
    %201 = vmatprep.subr.mxu0 0.0
    %202 = vmatpush1.msra.mxu0 0.0
    %203 = vmatprep.subr.mxu0 0.0
    %204 = vmatpush1.msra.mxu0 0.0
    %205 = vmatprep.subr.mxu0 0.0
    %206 = vmatpush1.msra.mxu0 0.0
    %207 = vmatprep.subr.mxu0 0.0
    %208 = vmatpush1.msra.mxu0 0.0
    %209 = vmatprep.subr.mxu0 0.0
    %210 = vmatpush1.msra.mxu0 0.0
    %211 = vmatprep.subr.mxu0 0.0
    %212 = vmatpush1.msra.mxu0 0.0
    %213 = vmatprep.subr.mxu0 0.0
    %214 = vmatpush1.msra.mxu0 0.0
    %215 = vmatprep.subr.mxu0 0.0
    %216 = vmatpush1.msra.mxu0 0.0
    %217 = vmatprep.subr.mxu0 0.0
    %218 = vmatpush1.msra.mxu0 0.0
    %219 = vmatprep.subr.mxu0 0.0
    %220 = vmatpush1.msra.mxu0 0.0
    %221 = vmatprep.mubr.f32.mxu0 0.0
    %222 = vmatmul.mubr.f32.gmra.mrb[0].mxu0 %v152
    %v223 = vpop.f32.mrb[0].mxu0
    %v224 = vadd.f32 0.0, %v223
    %v225 = vpop.f32.mrb[0].mxu0
    %226 = vmatprep.mubr.f32.mxu0 0.0
    %227 = vmatmul.mubr.f32.gmra.mrb[0].mxu0 %v155
    %v228 = vpop.f32.mrb[0].mxu0
    %v229 = vadd.f32 0.0, %v228
    %v230 = vpop.f32.mrb[0].mxu0
    %231 = vdwg.mxu0
    %v232 = vadd.f32 %v140, %v224
    %v233 = vadd.f32 %v141, %v229
    %234 = vst.msk [vmem:[#allocation2] sm:$0xff] %vm48, %v232
    %235 = vst.msk [vmem:[#allocation2 + $0x8] sm:$0xff] %vm48, %v233
    // Predicated region
    $region26: #{_ffn_call.1} parent=1 // pred_check
      %p236 = pneg %p21
    $region27: #{_ffn_call.1} parent=1 // pred_check_branch
      %238 = sbr.rel (%p236) target = $region29
    $region28: #{_ffn_call.1} parent=1 // pred_region
      %v239 = vld [vmem:[#allocation2] sm:$0xff]
      %v240 = vld [vmem:[#allocation2 + $0x8] sm:$0xff]
      %241 = vst.msk [vmem:[#allocation3] sm:$0xff] %vm48, %v239
      %242 = vst.msk [vmem:[#allocation3 + $0x8] sm:$0xff] %vm48, %v240
    $region29: #{_ffn_call.1} parent=1 // pred_fallthru
      _
    // Predicated region
    $region30: #{_ffn_call.1} parent=1 // pred_check
      _
    $region31: #{_ffn_call.1} parent=1 // pred_check_branch
      %244 = sbr.rel (0) target = $region33
    $region32: #{_ffn_call.1} parent=1 // pred_region
      %s246 = ssub.s32 256, 256
      %247 = vsyncadd [#allocation4], %s246
      %s248 = sshll.u32 [#allocation3], 4
      %s249 = int_to_ptr.vmem [resolvable:$true] %s248
      %254 = dma.vmem_to_hbm [thread:$0]  %s249, 256, %s5, [#allocation4], 128, 128, 8
    $region33: #{_ffn_call.1} parent=1 // pred_fallthru
      _
    // Predicated region
    $region34: #{_ffn_call.1} parent=1 // pred_check
      _
    $region35: #{_ffn_call.1} parent=1 // pred_check_branch
      %256 = sbr.rel (0) target = $region37
    $region36: #{_ffn_call.1} parent=1 // pred_region
      %257 = dma.done [#allocation4], 256
    $region37: #{_ffn_call.1} parent=1 // pred_fallthru
      _
    %258 = vsyncpa [#allocation4], 1

</llo_original>
